<compile_context>
chip_gen: v7x
topology: tpu7x:2x2x1
jax: 0.10.0
libtpu: 0.0.40
codegen_flags: <defaults>
</compile_context>

<pallas_src>
import jax
import jax.numpy as jnp
from jax.experimental import pallas as pl
from jax.experimental.pallas import tpu as pltpu

# ---------------- small synthetic dimensions ----------------
B = 2            # batch
SEQ = 8          # token sequence length
VOCAB = 64       # stub vocab
DT = 32          # clip text hidden size  (text_hidden_size)
DI = 64          # clip image embed size  (512 in the real module)
H = 32           # hidden_size            (512 in the real module)
PIX_C, PIX_S = 3, 16     # pixel_values: (B, 3, 16, 16) NCHW

LANE = 128       # lane-dense padded feature width
TB = 16          # batch tile (bf16 packs 16 sublanes per vreg)
B_PAD = 32       # padded batch, multiple of TB -> grid=(2,) exercises the batch axis
H3 = 3 * H       # 96
SARC_COL = DT + DI               # column of the sarcasm score in the x slab

# Explicit, documented tolerance: matmul operands are bf16 (f32 accumulation),
# and the packed activation slab (incl. the scalar sarcasm score) is bf16.
ATOL_BF16 = 2e-2


# ---------------- Pallas kernel: fused projections + fusion head ----------------
def head_kernel(x_ref, w0_ref, w1_ref, w2_ref, b_ref, out_ref):
    """x:(TB,128) bf16, w*:(128,128) bf16, b:(3,128) f32, out:(TB,128) bf16
    (only column 0 of `out` is meaningful)."""
    x = x_ref[...]                       # (TB, 128) bf16
    b = b_ref[...]                       # (3, 128) f32

    # [text_proj | image_proj | sarcasm_proj] == x @ block_diag(wt, wi, ws) + [bt|bi|bs]
    combined = jnp.dot(x, w0_ref[...], preferred_element_type=jnp.float32) + b[0:1, :]

    # fusion: ReLU -> Dropout(id) -> Linear(3H->H) -> ReLU -> Dropout(id) -> Linear(H->1)
    # (ReLU / bias / sigmoid in f32 on the VPU/EUP; only MXU operands cast to bf16)
    c = jnp.maximum(combined, 0.0).astype(jnp.bfloat16)
    h = jnp.dot(c, w1_ref[...], preferred_element_type=jnp.float32) + b[1:2, :]
    h = jnp.maximum(h, 0.0).astype(jnp.bfloat16)
    logits = jnp.dot(h, w2_ref[...], preferred_element_type=jnp.float32) + b[2:3, :]

    out_ref[...] = jax.nn.sigmoid(logits).astype(out_ref.dtype)   # lane-dense bf16 store


def pack_head_params(p):
    """Pack the classifier-head nn.Linear weights into three (128,128) bf16
    weight slabs + one (3,128) f32 bias slab.  Called ONCE at param-load time,
    outside the jitted per-call forward.  All pad entries are exactly zero
    (see invariant note at top of file)."""
    w0 = jnp.zeros((LANE, LANE), jnp.float32)
    w0 = w0.at[0:DT, 0:H].set(p["wt"])                            # text_projection
    w0 = w0.at[DT:DT + DI, H:2 * H].set(p["wi"])                  # image_projection
    w0 = w0.at[SARC_COL:SARC_COL + 1, 2 * H:3 * H].set(p["ws"])   # sarcasm_projection

    w1 = jnp.zeros((LANE, LANE), jnp.float32)
    w1 = w1.at[0:H3, 0:H].set(p["w1"])                            # fusion Linear(3H->H)

    w2 = jnp.zeros((LANE, LANE), jnp.float32)
    w2 = w2.at[0:H, 0:1].set(p["w2"])                             # fusion Linear(H->1)

    b_slab = jnp.zeros((3, LANE), jnp.float32)
    b_slab = b_slab.at[0, 0:H3].set(
        jnp.concatenate([p["bt"], p["bi"], p["bs"]], axis=1)[0])
    b_slab = b_slab.at[1, 0:H].set(p["b1"][0])
    b_slab = b_slab.at[2, 0:1].set(p["b2"][0])

    return (w0.astype(jnp.bfloat16), w1.astype(jnp.bfloat16),
            w2.astype(jnp.bfloat16), b_slab)


def hateful_meme_head(text_embeds, image_embeds, sarcasm_score,
                      w0, w1, w2, b_slab):
    """Pallas wrapper: pack activations into one lane-dense slab, one call with
    a parallel batch grid axis; weights stay VMEM-resident across steps."""
    bsz = text_embeds.shape[0]
    x = jnp.zeros((B_PAD, LANE), jnp.float32)
    x = x.at[:bsz, 0:DT].set(text_embeds)
    x = x.at[:bsz, DT:DT + DI].set(image_embeds)
    x = x.at[:bsz, SARC_COL:SARC_COL + 1].set(sarcasm_score)
    x = x.astype(jnp.bfloat16)

    out = pl.pallas_call(
        head_kernel,
        out_shape=jax.ShapeDtypeStruct((B_PAD, LANE), jnp.bfloat16),
        grid=(B_PAD // TB,),
        in_specs=[
            pl.BlockSpec((TB, LANE), lambda i: (i, 0)),       # activation slab tile
            pl.BlockSpec((LANE, LANE), lambda i: (0, 0)),     # w0: constant over batch axis
            pl.BlockSpec((LANE, LANE), lambda i: (0, 0)),     # w1: constant over batch axis
            pl.BlockSpec((LANE, LANE), lambda i: (0, 0)),     # w2: constant over batch axis
            pl.BlockSpec((3, LANE), lambda i: (0, 0)),        # bias slab: constant
        ],
        out_specs=pl.BlockSpec((TB, LANE), lambda i: (i, 0)),
        compiler_params=pltpu.CompilerParams(
            dimension_semantics=("parallel",)),
    )(x, w0, w1, w2, b_slab)
    return out[:bsz, 0:1].astype(jnp.float32)


# ---------------- plain-JAX glue: deterministic stub encoders ----------------
def stub_clip_encoder(clip_input_ids, clip_attention_mask, pixel_values, p):
    # text tower: embedding lookup + masked mean pool -> (B, DT)
    tok = jnp.take(p["clip_tok_emb"], clip_input_ids, axis=0)           # (B, SEQ, DT)
    m = clip_attention_mask[..., None].astype(jnp.float32)
    text_embeds = (tok * m).sum(1) / jnp.maximum(m.sum(1), 1.0)
    # image tower: flatten NCHW pixels + linear -> (B, DI)
    flat = pixel_values.reshape(pixel_values.shape[0], -1)              # (B, 3*16*16)
    image_embeds = flat @ p["clip_img_w"] + p["clip_img_b"]
    return text_embeds, image_embeds


def stub_roberta_sarcasm(input_ids, attention_mask, p):
    # frozen sarcasm detector stub -> (B, 1)
    tok = jnp.take(p["rob_tok_emb"], input_ids, axis=0)                 # (B, SEQ, 16)
    m = attention_mask[..., None].astype(jnp.float32)
    pooled = (tok * m).sum(1) / jnp.maximum(m.sum(1), 1.0)
    return pooled @ p["rob_w"] + p["rob_b"]                             # (B, 1)


@jax.jit
def forward(roberta_input_ids, roberta_attention_mask,
            clip_input_ids, clip_attention_mask, pixel_values,
            params, head_w0, head_w1, head_w2, head_b):
    text_embeds, image_embeds = stub_clip_encoder(
        clip_input_ids, clip_attention_mask, pixel_values, params)
    sarcasm_score = stub_roberta_sarcasm(
        roberta_input_ids, roberta_attention_mask, params)
    return hateful_meme_head(text_embeds, image_embeds, sarcasm_score,
                             head_w0, head_w1, head_w2, head_b)


# ---------------- pure-JAX f32 reference for the head (sanity check) ----------------
def head_reference(text_embeds, image_embeds, sarcasm_score, p):
    tp = text_embeds @ p["wt"] + p["bt"]
    ip = image_embeds @ p["wi"] + p["bi"]
    sp = sarcasm_score @ p["ws"] + p["bs"]
    combined = jnp.concatenate([tp, ip, sp], axis=1)
    h = jnp.maximum(combined, 0.0) @ p["w1"] + p["b1"]
    h = jnp.maximum(h, 0.0)
    return jax.nn.sigmoid(h @ p["w2"] + p["b2"])


# ---------------- deterministic parameter init ----------------
def init_params(key):
    ks = jax.random.split(key, 14)
    s = 0.05
    return {
        # stub encoders
        "clip_tok_emb": s * jax.random.normal(ks[0], (VOCAB, DT), jnp.float32),
        "clip_img_w":   s * jax.random.normal(ks[1], (PIX_C * PIX_S * PIX_S, DI), jnp.float32),
        "clip_img_b":   s * jax.random.normal(ks[2], (1, DI), jnp.float32),
        "rob_tok_emb":  s * jax.random.normal(ks[3], (VOCAB, 16), jnp.float32),
        "rob_w":        s * jax.random.normal(ks[4], (16, 1), jnp.float32),
        "rob_b":        s * jax.random.normal(ks[5], (1, 1), jnp.float32),
        # classifier head (nn.Linear weights pre-transposed to (in, out))
        "wt":  s * jax.random.normal(ks[6], (DT, H), jnp.float32),
        "bt":  s * jax.random.normal(ks[7], (1, H), jnp.float32),
        "wi":  s * jax.random.normal(ks[8], (DI, H), jnp.float32),
        "bi":  s * jax.random.normal(ks[9], (1, H), jnp.float32),
        "ws":  s * jax.random.normal(ks[10], (1, H), jnp.float32),
        "bs":  s * jax.random.normal(ks[11], (1, H), jnp.float32),
        "w1":  s * jax.random.normal(ks[12], (H3, H), jnp.float32),
        "b1":  jnp.zeros((1, H), jnp.float32),
        "w2":  s * jax.random.normal(ks[13], (H, 1), jnp.float32),
        "b2":  jnp.zeros((1, 1), jnp.float32),
    }


if __name__ == "__main__":
    key = jax.random.PRNGKey(0)
    k_par, k1, k2, k3 = jax.random.split(key, 4)
    params = init_params(k_par)

    # Pack the head weights ONCE (outside the per-call jitted forward).
    head_w0, head_w1, head_w2, head_b = jax.tree_util.tree_map(
        jax.block_until_ready, pack_head_params(params))

    roberta_input_ids = jax.random.randint(k1, (B, SEQ), 0, VOCAB)
    roberta_attention_mask = jnp.ones((B, SEQ), jnp.int32)
    clip_input_ids = jax.random.randint(k2, (B, SEQ), 0, VOCAB)
    clip_attention_mask = jnp.ones((B, SEQ), jnp.int32)
    pixel_values = jax.random.normal(k3, (B, PIX_C, PIX_S, PIX_S), jnp.float32)  # NCHW

    out = forward(roberta_input_ids, roberta_attention_mask,
                  clip_input_ids, clip_attention_mask, pixel_values,
                  params, head_w0, head_w1, head_w2, head_b)
    out = jax.block_until_ready(out)
    assert out.shape == (B, 1), out.shape

    # cross-check the Pallas head (bf16 matmuls, f32 accum, bf16 store) against a pure-f32 ref
    te, ie = stub_clip_encoder(clip_input_ids, clip_attention_mask, pixel_values, params)
    sc = stub_roberta_sarcasm(roberta_input_ids, roberta_attention_mask, params)
    ref = head_reference(te, ie, sc, params)
    assert jnp.allclose(out, ref, atol=ATOL_BF16, rtol=0.0), (out, ref)

    print("KERNEL_OK")
</pallas_src>

<mosaic_0001>
module attributes {stable_mosaic.version = 11 : i64} {
  func.func @head_kernel(%arg0: i32, %arg1: memref<16x128xbf16, #tpu.memory_space<vmem>>, %arg2: memref<128x128xbf16, #tpu.memory_space<vmem>>, %arg3: memref<128x128xbf16, #tpu.memory_space<vmem>>, %arg4: memref<128x128xbf16, #tpu.memory_space<vmem>>, %arg5: memref<3x128xf32, #tpu.memory_space<vmem>>, %arg6: memref<16x128xbf16, #tpu.memory_space<vmem>>) attributes {dimension_semantics = [#tpu.dimension_semantics<parallel>], iteration_bounds = array<i64: 2>, scalar_prefetch = 0 : i64, scratch_operands = 0 : i64, tpu.core_type = #tpu.core_type<tc>, window_params = [{transform_indices = @transform_0, window_bounds = array<i64: 16, 128>}, {pipeline_mode = #tpu.pipeline_mode<synchronous>, transform_indices = @transform_1, window_bounds = array<i64: 128, 128>}, {pipeline_mode = #tpu.pipeline_mode<synchronous>, transform_indices = @transform_2, window_bounds = array<i64: 128, 128>}, {pipeline_mode = #tpu.pipeline_mode<synchronous>, transform_indices = @transform_3, window_bounds = array<i64: 128, 128>}, {pipeline_mode = #tpu.pipeline_mode<synchronous>, transform_indices = @transform_4, window_bounds = array<i64: 3, 128>}, {transform_indices = @transform_5, window_bounds = array<i64: 16, 128>}]} {
    %c0 = arith.constant 0 : index
    %c0_0 = arith.constant 0 : index
    %0 = vector.load %arg1[%c0, %c0_0] : memref<16x128xbf16, #tpu.memory_space<vmem>>, vector<16x128xbf16>
    %c0_1 = arith.constant 0 : index
    %c0_2 = arith.constant 0 : index
    %1 = vector.load %arg5[%c0_1, %c0_2] : memref<3x128xf32, #tpu.memory_space<vmem>>, vector<3x128xf32>
    %c0_3 = arith.constant 0 : index
    %c0_4 = arith.constant 0 : index
    %2 = vector.load %arg2[%c0_3, %c0_4] : memref<128x128xbf16, #tpu.memory_space<vmem>>, vector<128x128xbf16>
    %cst = arith.constant dense<0.000000e+00> : vector<16x128xf32>
    %3 = tpu.matmul %0, %2, %cst {dimension_numbers = #tpu.dot_dimension_numbers<[1], [0], [0], [1], [0, 0, 1, 1], [], []>} : vector<16x128xbf16>, vector<128x128xbf16>, vector<16x128xf32> -> vector<16x128xf32>
    %4 = vector.extract_strided_slice %1 {offsets = [0, 0], sizes = [1, 128], strides = [1, 1]} : vector<3x128xf32> to vector<1x128xf32>
    %5 = vector.broadcast %4 : vector<1x128xf32> to vector<16x128xf32>
    %6 = arith.addf %3, %5 : vector<16x128xf32>
    %cst_5 = arith.constant 0.000000e+00 : f32
    %7 = vector.broadcast %cst_5 : f32 to vector<16x128xf32>
    %8 = arith.maximumf %6, %7 : vector<16x128xf32>
    %9 = arith.truncf %8 : vector<16x128xf32> to vector<16x128xbf16>
    %c0_6 = arith.constant 0 : index
    %c0_7 = arith.constant 0 : index
    %10 = vector.load %arg3[%c0_6, %c0_7] : memref<128x128xbf16, #tpu.memory_space<vmem>>, vector<128x128xbf16>
    %cst_8 = arith.constant dense<0.000000e+00> : vector<16x128xf32>
    %11 = tpu.matmul %9, %10, %cst_8 {dimension_numbers = #tpu.dot_dimension_numbers<[1], [0], [0], [1], [0, 0, 1, 1], [], []>} : vector<16x128xbf16>, vector<128x128xbf16>, vector<16x128xf32> -> vector<16x128xf32>
    %12 = vector.extract_strided_slice %1 {offsets = [1, 0], sizes = [1, 128], strides = [1, 1]} : vector<3x128xf32> to vector<1x128xf32>
    %13 = vector.broadcast %12 : vector<1x128xf32> to vector<16x128xf32>
    %14 = arith.addf %11, %13 : vector<16x128xf32>
    %cst_9 = arith.constant 0.000000e+00 : f32
    %15 = vector.broadcast %cst_9 : f32 to vector<16x128xf32>
    %16 = arith.maximumf %14, %15 : vector<16x128xf32>
    %17 = arith.truncf %16 : vector<16x128xf32> to vector<16x128xbf16>
    %c0_10 = arith.constant 0 : index
    %c0_11 = arith.constant 0 : index
    %18 = vector.load %arg4[%c0_10, %c0_11] : memref<128x128xbf16, #tpu.memory_space<vmem>>, vector<128x128xbf16>
    %cst_12 = arith.constant dense<0.000000e+00> : vector<16x128xf32>
    %19 = tpu.matmul %17, %18, %cst_12 {dimension_numbers = #tpu.dot_dimension_numbers<[1], [0], [0], [1], [0, 0, 1, 1], [], []>} : vector<16x128xbf16>, vector<128x128xbf16>, vector<16x128xf32> -> vector<16x128xf32>
    %20 = vector.extract_strided_slice %1 {offsets = [2, 0], sizes = [1, 128], strides = [1, 1]} : vector<3x128xf32> to vector<1x128xf32>
    %21 = vector.broadcast %20 : vector<1x128xf32> to vector<16x128xf32>
    %22 = arith.addf %19, %21 : vector<16x128xf32>
    %23 = arith.negf %22 : vector<16x128xf32>
    %24 = math.exp %23 : vector<16x128xf32>
    %cst_13 = arith.constant 1.000000e+00 : f32
    %25 = vector.broadcast %cst_13 : f32 to vector<16x128xf32>
    %26 = arith.addf %25, %24 : vector<16x128xf32>
    %27 = arith.divf %25, %26 : vector<16x128xf32>
    %28 = arith.truncf %27 : vector<16x128xf32> to vector<16x128xbf16>
    %c0_14 = arith.constant 0 : index
    %c0_15 = arith.constant 0 : index
    %29 = vector.load %arg6[%c0_14, %c0_15] : memref<16x128xbf16, #tpu.memory_space<vmem>>, vector<16x128xbf16>
    tpu.vector_store %arg6[%c0_14, %c0_15], %28 {strides = array<i32>} : memref<16x128xbf16, #tpu.memory_space<vmem>>, vector<16x128xbf16>,
    return
  }
  func.func @transform_0(%arg0: i32) -> (i32, i32) {
    %c0_i32 = arith.constant 0 : i32
    %c0_i32_0 = arith.constant 0 : i32
    return %arg0, %c0_i32 : i32, i32
  }
  func.func @transform_1(%arg0: i32) -> (i32, i32) {
    %c0_i32 = arith.constant 0 : i32
    %c0_i32_0 = arith.constant 0 : i32
    %c0_i32_1 = arith.constant 0 : i32
    return %c0_i32, %c0_i32_0 : i32, i32
  }
  func.func @transform_2(%arg0: i32) -> (i32, i32) {
    %c0_i32 = arith.constant 0 : i32
    %c0_i32_0 = arith.constant 0 : i32
    %c0_i32_1 = arith.constant 0 : i32
    return %c0_i32, %c0_i32_0 : i32, i32
  }
  func.func @transform_3(%arg0: i32) -> (i32, i32) {
    %c0_i32 = arith.constant 0 : i32
    %c0_i32_0 = arith.constant 0 : i32
    %c0_i32_1 = arith.constant 0 : i32
    return %c0_i32, %c0_i32_0 : i32, i32
  }
  func.func @transform_4(%arg0: i32) -> (i32, i32) {
    %c0_i32 = arith.constant 0 : i32
    %c0_i32_0 = arith.constant 0 : i32
    %c0_i32_1 = arith.constant 0 : i32
    return %c0_i32, %c0_i32_0 : i32, i32
  }
  func.func @transform_5(%arg0: i32) -> (i32, i32) {
    %c0_i32 = arith.constant 0 : i32
    %c0_i32_0 = arith.constant 0 : i32
    return %arg0, %c0_i32 : i32, i32
  }
}

</mosaic_0001>

<llo_original>
// kernel: forward.1
$region0: #{forward.1}
  #allocation0 [shape = 'u32[]', space=smem, size = 0x4, offset = 0x4, fixed_abs, tag = 'smem constant byte address 0x4 - core index']
  #allocation1 [shape = 'u32[144,128]{1,0:T(1,128)}', space=vmem, size = 0x12000, scoped, tag = 'internal scratch']
  %s0 = inlined_call_operand.vmem [shape: bf16[32,128], index: 0, kind: input, shape index: {}]
  %s1 = inlined_call_operand.vmem [shape: bf16[128,128], index: 1, kind: input, shape index: {}]
  %s2 = inlined_call_operand.vmem [shape: bf16[128,128], index: 2, kind: input, shape index: {}]
  %s3 = inlined_call_operand.vmem [shape: bf16[128,128], index: 3, kind: input, shape index: {}]
  %s4 = inlined_call_operand.vmem [shape: f32[3,128], index: 4, kind: input, shape index: {}]
  %s5 = inlined_call_operand.vmem [shape: bf16[32,128], index: 5, kind: output, shape index: {}]
  %s6 = sld [smem:[#allocation0]]
  $region53: #{forward.1} parent=0
    _
  %s8 = ssub.s32 1, %s6
  %s9 = scalar_select 0, %s8, %s6
  loop: start=0, step=1, limit=4
  $region2: #{forward.1} parent=0 // loop_pre_header
    _
  $region3: #{forward.1} parent=0 // loop_header
    %s11 = sphi 0, %s15
    %p12 = scmp.ge.s32.totalorder %s11, 4
    %s21 = sphi 0, %s23
    %s24 = sphi 0, %s21
    %s25 = sphi 0, %s24
    %s41 = sphi 0, %s25
    %s45 = sphi 0, %s45
    %s47 = sphi 0, %s45
    %s48 = sphi 0, %s47
    %s62 = sphi 0, %s48
    %s66 = sphi 0, %s66
    %s68 = sphi 0, %s66
    %s69 = sphi 0, %s68
    %s83 = sphi 0, %s69
    %s87 = sphi 0, %s87
    %s89 = sphi 0, %s87
    %s90 = sphi 0, %s89
    %s104 = sphi 0, %s90
    %s108 = sphi 0, %s108
    %s110 = sphi 0, %s108
    %s111 = sphi 0, %s110
    %s125 = sphi 0, %s111
    %s131 = sphi 0, %s133
    %s134 = sphi 0, %s131
    %s135 = sphi 0, %s134
    %s151 = sphi 0, %s135
  $region4: #{forward.1} parent=0 // loop_header_branch
    %14 = sbr.rel (%p12) target = $region8
  $region5: #{forward.1} parent=0 // loop_body
    %s16 = ssub.s32 %s11, 1
    %s17 = ssub.s32 %s11, 2
    %s18 = sadd.s32 %s11, 1
    %s19 = ssub.s32 %s11, %s18
    %p20 = scmp.eq.s32.totalorder %s19, 0
    %s22 = sadd.s32 %s21, 1
    %s23 = scalar_select %p20, %s21, %s22
    %p26 = pneg %p20
    %p27 = scmp.eq.s32.totalorder %s11, 1
    %p28 = por %p26, %p27
    %p29 = scmp.ne.s32.totalorder %s21, %s24
    %p30 = scmp.eq.s32.totalorder %s11, 0
    %p31 = por %p29, %p30
    %p32 = scmp.ne.s32.totalorder %s21, %s24
    %p33 = scmp.eq.s32.totalorder %s16, 1
    %p34 = por %p32, %p33
    %p35 = scmp.ne.s32.totalorder %s24, %s25
    %p36 = scmp.eq.s32.totalorder %s16, 0
    %p37 = por %p35, %p36
    %p38 = scmp.ne.s32.totalorder %s24, %s25
    %p39 = scmp.eq.s32.totalorder %s17, 1
    %p40 = por %p38, %p39
    %p42 = scmp.ne.s32.totalorder %s25, %s41
    %p43 = scmp.eq.s32.totalorder %s17, 0
    %p44 = por %p42, %p43
    %s46 = sadd.s32 %s45, 1
    %p49 = scmp.eq.s32.totalorder %s11, 1
    %p50 = scmp.ne.s32.totalorder %s45, %s47
    %p51 = scmp.eq.s32.totalorder %s11, 0
    %p52 = por %p50, %p51
    %p53 = scmp.ne.s32.totalorder %s45, %s47
    %p54 = scmp.eq.s32.totalorder %s16, 1
    %p55 = por %p53, %p54
    %p56 = scmp.ne.s32.totalorder %s47, %s48
    %p57 = scmp.eq.s32.totalorder %s16, 0
    %p58 = por %p56, %p57
    %p59 = scmp.ne.s32.totalorder %s47, %s48
    %p60 = scmp.eq.s32.totalorder %s17, 1
    %p61 = por %p59, %p60
    %p63 = scmp.ne.s32.totalorder %s48, %s62
    %p64 = scmp.eq.s32.totalorder %s17, 0
    %p65 = por %p63, %p64
    %s67 = sadd.s32 %s66, 1
    %p70 = scmp.eq.s32.totalorder %s11, 1
    %p71 = scmp.ne.s32.totalorder %s66, %s68
    %p72 = scmp.eq.s32.totalorder %s11, 0
    %p73 = por %p71, %p72
    %p74 = scmp.ne.s32.totalorder %s66, %s68
    %p75 = scmp.eq.s32.totalorder %s16, 1
    %p76 = por %p74, %p75
    %p77 = scmp.ne.s32.totalorder %s68, %s69
    %p78 = scmp.eq.s32.totalorder %s16, 0
    %p79 = por %p77, %p78
    %p80 = scmp.ne.s32.totalorder %s68, %s69
    %p81 = scmp.eq.s32.totalorder %s17, 1
    %p82 = por %p80, %p81
    %p84 = scmp.ne.s32.totalorder %s69, %s83
    %p85 = scmp.eq.s32.totalorder %s17, 0
    %p86 = por %p84, %p85
    %s88 = sadd.s32 %s87, 1
    %p91 = scmp.eq.s32.totalorder %s11, 1
    %p92 = scmp.ne.s32.totalorder %s87, %s89
    %p93 = scmp.eq.s32.totalorder %s11, 0
    %p94 = por %p92, %p93
    %p95 = scmp.ne.s32.totalorder %s87, %s89
    %p96 = scmp.eq.s32.totalorder %s16, 1
    %p97 = por %p95, %p96
    %p98 = scmp.ne.s32.totalorder %s89, %s90
    %p99 = scmp.eq.s32.totalorder %s16, 0
    %p100 = por %p98, %p99
    %p101 = scmp.ne.s32.totalorder %s89, %s90
    %p102 = scmp.eq.s32.totalorder %s17, 1
    %p103 = por %p101, %p102
    %p105 = scmp.ne.s32.totalorder %s90, %s104
    %p106 = scmp.eq.s32.totalorder %s17, 0
    %p107 = por %p105, %p106
    %s109 = sadd.s32 %s108, 1
    %p112 = scmp.eq.s32.totalorder %s11, 1
    %p113 = scmp.ne.s32.totalorder %s108, %s110
    %p114 = scmp.eq.s32.totalorder %s11, 0
    %p115 = por %p113, %p114
    %p116 = scmp.ne.s32.totalorder %s108, %s110
    %p117 = scmp.eq.s32.totalorder %s16, 1
    %p118 = por %p116, %p117
    %p119 = scmp.ne.s32.totalorder %s110, %s111
    %p120 = scmp.eq.s32.totalorder %s16, 0
    %p121 = por %p119, %p120
    %p122 = scmp.ne.s32.totalorder %s110, %s111
    %p123 = scmp.eq.s32.totalorder %s17, 1
    %p124 = por %p122, %p123
    %p126 = scmp.ne.s32.totalorder %s111, %s125
    %p127 = scmp.eq.s32.totalorder %s17, 0
    %p128 = por %p126, %p127
    %s129 = ssub.s32 %s11, %s18
    %p130 = scmp.eq.s32.totalorder %s129, 0
    %s132 = sadd.s32 %s131, 1
    %s133 = scalar_select %p130, %s131, %s132
    %p136 = pneg %p130
    %p137 = scmp.eq.s32.totalorder %s11, 1
    %p138 = por %p136, %p137
    %p139 = scmp.ne.s32.totalorder %s131, %s134
    %p140 = scmp.eq.s32.totalorder %s11, 0
    %p141 = por %p139, %p140
    %p142 = scmp.ne.s32.totalorder %s131, %s134
    %p143 = scmp.eq.s32.totalorder %s16, 1
    %p144 = por %p142, %p143
    %p145 = scmp.ne.s32.totalorder %s134, %s135
    %p146 = scmp.eq.s32.totalorder %s16, 0
    %p147 = por %p145, %p146
    %p148 = scmp.ne.s32.totalorder %s134, %s135
    %p149 = scmp.eq.s32.totalorder %s17, 1
    %p150 = por %p148, %p149
    %p152 = scmp.ne.s32.totalorder %s135, %s151
    %p153 = scmp.eq.s32.totalorder %s17, 0
    %p154 = por %p152, %p153
    %p155 = scmp.le.s32.totalorder 1, %s11
    %p156 = scmp.lt.s32.totalorder %s11, 3
    %p157 = pnand %p155, %p156
    %p158 = pneg %p157
    // Predicated region
    $region9: #{forward.1} parent=5 // pred_check
      _
    $region10: #{forward.1} parent=5 // pred_check_branch
      %160 = sbr.rel (%p157) target = $region12
    $region11: #{forward.1} parent=5 // pred_region
      %s161 = ssub.s32 %s11, 1
      // Predicated region
      $region13: #{forward.1} parent=11 // pred_check
        %p162 = pneg %p58
      $region14: #{forward.1} parent=11 // pred_check_branch
        %164 = sbr.rel (%p162) target = $region16
      $region15: #{forward.1} parent=11 // pred_region
        _
      $region16: #{forward.1} parent=11 // pred_fallthru
        _
      // Predicated region
      $region17: #{forward.1} parent=11 // pred_check
        %p165 = pneg %p79
      $region18: #{forward.1} parent=11 // pred_check_branch
        %167 = sbr.rel (%p165) target = $region20
      $region19: #{forward.1} parent=11 // pred_region
        _
      $region20: #{forward.1} parent=11 // pred_fallthru
        _
      // Predicated region
      $region21: #{forward.1} parent=11 // pred_check
        %p168 = pneg %p100
      $region22: #{forward.1} parent=11 // pred_check_branch
        %170 = sbr.rel (%p168) target = $region24
      $region23: #{forward.1} parent=11 // pred_region
        _
      $region24: #{forward.1} parent=11 // pred_fallthru
        _
      // Predicated region
      $region25: #{forward.1} parent=11 // pred_check
        %p171 = pneg %p121
      $region26: #{forward.1} parent=11 // pred_check_branch
        %173 = sbr.rel (%p171) target = $region28
      $region27: #{forward.1} parent=11 // pred_region
        _
      $region28: #{forward.1} parent=11 // pred_fallthru
        _
    $region12: #{forward.1} parent=5 // pred_fallthru
      _
    %p174 = scmp.lt.s32.totalorder %s11, 2
    // Predicated region
    $region29: #{forward.1} parent=5 // pred_check
      %p175 = pneg %p174
    $region30: #{forward.1} parent=5 // pred_check_branch
      %177 = sbr.rel (%p175) target = $region32
    $region31: #{forward.1} parent=5 // pred_region
      // Predicated region
      $region33: #{forward.1} parent=31 // pred_check
        %p178 = pneg %p31
      $region34: #{forward.1} parent=31 // pred_check_branch
        %180 = sbr.rel (%p178) target = $region36
      $region35: #{forward.1} parent=31 // pred_region
        %s181 = smul.u32 2, %s11
        %p182 = scmp.lt.s32.totalorder %s181, 3
        %s183 = scalar_select %p182, %s181, 3
        %s184 = smul.addr %s183, 4
        %s185 = scalar_lea.vmem %s0, %s184
        %s186 = smul.u32 2, %s11
      $region36: #{forward.1} parent=31 // pred_fallthru
        _
    $region32: #{forward.1} parent=5 // pred_fallthru
      _
    %p187 = scmp.le.s32.totalorder 1, %s11
    %p188 = scmp.lt.s32.totalorder %s11, 3
    %p189 = pnand %p187, %p188
    %p190 = pneg %p189
    // Predicated region
    $region37: #{forward.1} parent=5 // pred_check
      _
    $region38: #{forward.1} parent=5 // pred_check_branch
      %192 = sbr.rel (%p189) target = $region40
    $region39: #{forward.1} parent=5 // pred_region
      %s193 = ssub.s32 %s11, 1
      %s194 = smul.u32 2, %s16
      %p195 = scmp.lt.s32.totalorder %s194, 3
      %s196 = scalar_select %p195, %s194, 3
      %s197 = smul.addr %s196, 4
      %s198 = scalar_lea.vmem %s0, %s197
      %p199 = pneg %p37
      %p200 = pneg %p34
      %p201 = pneg %p58
      %p202 = pneg %p55
      %p203 = pneg %p79
      %p204 = pneg %p76
      %p205 = pneg %p100
      %p206 = pneg %p97
      %p207 = pneg %p121
      %p208 = pneg %p118
      %p209 = pneg %p147
      %p210 = pneg %p144
      %s211 = smul.u32 2, %s16
      %p212 = scmp.lt.s32.totalorder %s211, 3
      %s213 = scalar_select %p212, %s211, 3
      %s214 = smul.addr %s213, 4
      %s215 = scalar_lea.vmem %s5, %s214
      %s216 = smul.u32 2, %s16
      %p217 = scmp.lt.s32.totalorder %s216, 3
      %s218 = scalar_select %p217, %s216, 3
      %s219 = smul.addr %s218, 4
      %s220 = scalar_lea.vmem %s0, %s219
      %s221 = smul.u32 2, %s16
      %s222 = smul.u32 2, %s16
      %p223 = scmp.lt.s32.totalorder %s222, 3
      %s224 = scalar_select %p223, %s222, 3
      %s225 = smul.addr %s224, 4
      %s226 = scalar_lea.vmem %s5, %s225
      %s227 = smul.u32 2, %s16
      %v229 = vld [vmem:[%s220] sm:$0xf]
      %v230 = vld [vmem:[%s220 + $0x4] sm:$0xf]
      %v231 = vld [vmem:[%s4] sm:$0x7]
      %v232 = vld [vmem:[%s1] sm:$0xf]
      %v233 = vld [vmem:[%s1 + $0x4] sm:$0xf]
      %v234 = vld [vmem:[%s1 + $0x8] sm:$0xf]
      %v235 = vld [vmem:[%s1 + $0xc] sm:$0xf]
      %v236 = vld [vmem:[%s1 + $0x10] sm:$0xf]
      %v237 = vld [vmem:[%s1 + $0x14] sm:$0xf]
      %v238 = vld [vmem:[%s1 + $0x18] sm:$0xf]
      %v239 = vld [vmem:[%s1 + $0x1c] sm:$0xf]
      %v240 = vld [vmem:[%s1 + $0x20] sm:$0xf]
      %v241 = vld [vmem:[%s1 + $0x24] sm:$0xf]
      %v242 = vld [vmem:[%s1 + $0x28] sm:$0xf]
      %v243 = vld [vmem:[%s1 + $0x2c] sm:$0xf]
      %v244 = vld [vmem:[%s1 + $0x30] sm:$0xf]
      %v245 = vld [vmem:[%s1 + $0x34] sm:$0xf]
      %v246 = vld [vmem:[%s1 + $0x38] sm:$0xf]
      %v247 = vld [vmem:[%s1 + $0x3c] sm:$0xf]
      %v248 = vlaneseq
      %v249 = vshrl.u32 %v248, 7
      %v250 = vsub.s32 0, %v249
      %v251 = vrot.slane %v231, %v250
      %v254 = vunpack.c.l.b16 %v229
      %v255 = vunpack.c.l.b16 %v230
      %v256 = vpack.c.b16 %v255, %v254
      %v274 = vunpack.c.l.b16 %v232
      %v275 = vunpack.c.l.b16 %v233
      %v276 = vunpack.c.l.b16 %v234
      %v277 = vunpack.c.l.b16 %v235
      %v278 = vunpack.c.l.b16 %v236
      %v279 = vunpack.c.l.b16 %v237
      %v280 = vunpack.c.l.b16 %v238
      %v281 = vunpack.c.l.b16 %v239
      %v282 = vunpack.c.l.b16 %v240
      %v283 = vunpack.c.l.b16 %v241
      %v284 = vunpack.c.l.b16 %v242
      %v285 = vunpack.c.l.b16 %v243
      %v286 = vunpack.c.l.b16 %v244
      %v287 = vunpack.c.l.b16 %v245
      %v288 = vunpack.c.l.b16 %v246
      %v289 = vunpack.c.l.b16 %v247
      %v290 = vpack.c.b16 %v275, %v274
      %v291 = vpack.c.b16 %v277, %v276
      %v292 = vpack.c.b16 %v279, %v278
      %v293 = vpack.c.b16 %v281, %v280
      %v294 = vpack.c.b16 %v283, %v282
      %v295 = vpack.c.b16 %v285, %v284
      %v296 = vpack.c.b16 %v287, %v286
      %v297 = vpack.c.b16 %v289, %v288
      %306 = vmatprep.subr.bf16.mxu0 0
      %307 = vmatpush1.bf16.msra.mxu0 %v290
      %308 = vmatprep.subr.bf16.mxu0 0
      %309 = vmatpush1.bf16.msra.mxu0 %v291
      %310 = vmatprep.subr.bf16.mxu0 0
      %311 = vmatpush1.bf16.msra.mxu0 %v292
      %312 = vmatprep.subr.bf16.mxu0 0
      %313 = vmatpush1.bf16.msra.mxu0 %v293
      %314 = vmatprep.subr.bf16.mxu0 0
      %315 = vmatpush1.bf16.msra.mxu0 %v294
      %316 = vmatprep.subr.bf16.mxu0 0
      %317 = vmatpush1.bf16.msra.mxu0 %v295
      %318 = vmatprep.subr.bf16.mxu0 0
      %319 = vmatpush1.bf16.msra.mxu0 %v296
      %320 = vmatprep.subr.bf16.mxu0 0
      %321 = vmatpush1.bf16.msra.mxu0 %v297
      %322 = vmatprep.subr.bf16.mxu0 0
      %323 = vmatpush1.bf16.msra.mxu0 0
      %324 = vmatprep.subr.bf16.mxu0 0
      %325 = vmatpush1.bf16.msra.mxu0 0
      %326 = vmatprep.subr.bf16.mxu0 0
      %327 = vmatpush1.bf16.msra.mxu0 0
      %328 = vmatprep.subr.bf16.mxu0 0
      %329 = vmatpush1.bf16.msra.mxu0 0
      %330 = vmatprep.subr.bf16.mxu0 0
      %331 = vmatpush1.bf16.msra.mxu0 0
      %332 = vmatprep.subr.bf16.mxu0 0
      %333 = vmatpush1.bf16.msra.mxu0 0
      %334 = vmatprep.subr.bf16.mxu0 0
      %335 = vmatpush1.bf16.msra.mxu0 0
      %336 = vmatprep.subr.bf16.mxu0 0
      %337 = vmatpush1.bf16.msra.mxu0 0
      %338 = vmatprep.mubr.bf16.mxu0 0
      %339 = vmatmul.mubr.bf16.gmra.mrb[0].mxu0 %v256
      %v340 = vpop.f32.mrb[0].mxu0
      %v341 = vadd.f32 %v251, %v340
      %v342 = vpop.f32.mrb[0].mxu0
      %v343 = vpop.f32.mrb[0].mxu0
      %v344 = vadd.f32 %v251, %v343
      %v345 = vpop.f32.mrb[0].mxu0
      %346 = vdwg.mxu0
      %v347 = vmax.f32 %v341, 0.0
      %v348 = vmax.f32 %v344, 0.0
      %v349 = vpack.c.bf16 %v348, %v347
      %v350 = vld [vmem:[%s2] sm:$0xf]
      %v351 = vld [vmem:[%s2 + $0x4] sm:$0xf]
      %v352 = vld [vmem:[%s2 + $0x8] sm:$0xf]
      %v353 = vld [vmem:[%s2 + $0xc] sm:$0xf]
      %v354 = vld [vmem:[%s2 + $0x10] sm:$0xf]
      %v355 = vld [vmem:[%s2 + $0x14] sm:$0xf]
      %v356 = vld [vmem:[%s2 + $0x18] sm:$0xf]
      %v357 = vld [vmem:[%s2 + $0x1c] sm:$0xf]
      %v358 = vld [vmem:[%s2 + $0x20] sm:$0xf]
      %v359 = vld [vmem:[%s2 + $0x24] sm:$0xf]
      %v360 = vld [vmem:[%s2 + $0x28] sm:$0xf]
      %v361 = vld [vmem:[%s2 + $0x2c] sm:$0xf]
      %v362 = vld [vmem:[%s2 + $0x30] sm:$0xf]
      %v363 = vld [vmem:[%s2 + $0x34] sm:$0xf]
      %v364 = vld [vmem:[%s2 + $0x38] sm:$0xf]
      %v365 = vld [vmem:[%s2 + $0x3c] sm:$0xf]
      %v366 = vlaneseq
      %v367 = vshrl.u32 %v366, 7
      %v368 = vsub.s32 1, %v367
      %v369 = vrot.slane %v231, %v368
      %v386 = vunpack.c.l.b16 %v350
      %v387 = vunpack.c.l.b16 %v351
      %v388 = vunpack.c.l.b16 %v352
      %v389 = vunpack.c.l.b16 %v353
      %v390 = vunpack.c.l.b16 %v354
      %v391 = vunpack.c.l.b16 %v355
      %v392 = vunpack.c.l.b16 %v356
      %v393 = vunpack.c.l.b16 %v357
      %v394 = vunpack.c.l.b16 %v358
      %v395 = vunpack.c.l.b16 %v359
      %v396 = vunpack.c.l.b16 %v360
      %v397 = vunpack.c.l.b16 %v361
      %v398 = vunpack.c.l.b16 %v362
      %v399 = vunpack.c.l.b16 %v363
      %v400 = vunpack.c.l.b16 %v364
      %v401 = vunpack.c.l.b16 %v365
      %v402 = vpack.c.b16 %v387, %v386
      %v403 = vpack.c.b16 %v389, %v388
      %v404 = vpack.c.b16 %v391, %v390
      %v405 = vpack.c.b16 %v393, %v392
      %v406 = vpack.c.b16 %v395, %v394
      %v407 = vpack.c.b16 %v397, %v396
      %v408 = vpack.c.b16 %v399, %v398
      %v409 = vpack.c.b16 %v401, %v400
      %418 = vmatprep.subr.bf16.mxu0 0
      %419 = vmatpush1.bf16.msra.mxu0 %v402
      %420 = vmatprep.subr.bf16.mxu0 0
      %421 = vmatpush1.bf16.msra.mxu0 %v403
      %422 = vmatprep.subr.bf16.mxu0 0
      %423 = vmatpush1.bf16.msra.mxu0 %v404
      %424 = vmatprep.subr.bf16.mxu0 0
      %425 = vmatpush1.bf16.msra.mxu0 %v405
      %426 = vmatprep.subr.bf16.mxu0 0
      %427 = vmatpush1.bf16.msra.mxu0 %v406
      %428 = vmatprep.subr.bf16.mxu0 0
      %429 = vmatpush1.bf16.msra.mxu0 %v407
      %430 = vmatprep.subr.bf16.mxu0 0
      %431 = vmatpush1.bf16.msra.mxu0 %v408
      %432 = vmatprep.subr.bf16.mxu0 0
      %433 = vmatpush1.bf16.msra.mxu0 %v409
      %434 = vmatprep.subr.bf16.mxu0 0
      %435 = vmatpush1.bf16.msra.mxu0 0
      %436 = vmatprep.subr.bf16.mxu0 0
      %437 = vmatpush1.bf16.msra.mxu0 0
      %438 = vmatprep.subr.bf16.mxu0 0
      %439 = vmatpush1.bf16.msra.mxu0 0
      %440 = vmatprep.subr.bf16.mxu0 0
      %441 = vmatpush1.bf16.msra.mxu0 0
      %442 = vmatprep.subr.bf16.mxu0 0
      %443 = vmatpush1.bf16.msra.mxu0 0
      %444 = vmatprep.subr.bf16.mxu0 0
      %445 = vmatpush1.bf16.msra.mxu0 0
      %446 = vmatprep.subr.bf16.mxu0 0
      %447 = vmatpush1.bf16.msra.mxu0 0
      %448 = vmatprep.subr.bf16.mxu0 0
      %449 = vmatpush1.bf16.msra.mxu0 0
      %450 = vmatprep.mubr.bf16.mxu0 0
      %451 = vmatmul.mubr.bf16.gmra.mrb[0].mxu0 %v349
      %v452 = vpop.f32.mrb[0].mxu0
      %v453 = vadd.f32 %v369, %v452
      %v454 = vpop.f32.mrb[0].mxu0
      %v455 = vpop.f32.mrb[0].mxu0
      %v456 = vadd.f32 %v369, %v455
      %v457 = vpop.f32.mrb[0].mxu0
      %458 = vdwg.mxu0
      %v459 = vmax.f32 %v453, 0.0
      %v460 = vmax.f32 %v456, 0.0
      %v461 = vpack.c.bf16 %v460, %v459
      %v462 = vld [vmem:[%s3] sm:$0xf]
      %v463 = vld [vmem:[%s3 + $0x4] sm:$0xf]
      %v464 = vld [vmem:[%s3 + $0x8] sm:$0xf]
      %v465 = vld [vmem:[%s3 + $0xc] sm:$0xf]
      %v466 = vld [vmem:[%s3 + $0x10] sm:$0xf]
      %v467 = vld [vmem:[%s3 + $0x14] sm:$0xf]
      %v468 = vld [vmem:[%s3 + $0x18] sm:$0xf]
      %v469 = vld [vmem:[%s3 + $0x1c] sm:$0xf]
      %v470 = vld [vmem:[%s3 + $0x20] sm:$0xf]
      %v471 = vld [vmem:[%s3 + $0x24] sm:$0xf]
      %v472 = vld [vmem:[%s3 + $0x28] sm:$0xf]
      %v473 = vld [vmem:[%s3 + $0x2c] sm:$0xf]
      %v474 = vld [vmem:[%s3 + $0x30] sm:$0xf]
      %v475 = vld [vmem:[%s3 + $0x34] sm:$0xf]
      %v476 = vld [vmem:[%s3 + $0x38] sm:$0xf]
      %v477 = vld [vmem:[%s3 + $0x3c] sm:$0xf]
      %v478 = vlaneseq
      %v479 = vshrl.u32 %v478, 7
      %v480 = vsub.s32 2, %v479
      %v481 = vrot.slane %v231, %v480
      %v498 = vunpack.c.l.b16 %v462
      %v499 = vunpack.c.l.b16 %v463
      %v500 = vunpack.c.l.b16 %v464
      %v501 = vunpack.c.l.b16 %v465
      %v502 = vunpack.c.l.b16 %v466
      %v503 = vunpack.c.l.b16 %v467
      %v504 = vunpack.c.l.b16 %v468
      %v505 = vunpack.c.l.b16 %v469
      %v506 = vunpack.c.l.b16 %v470
      %v507 = vunpack.c.l.b16 %v471
      %v508 = vunpack.c.l.b16 %v472
      %v509 = vunpack.c.l.b16 %v473
      %v510 = vunpack.c.l.b16 %v474
      %v511 = vunpack.c.l.b16 %v475
      %v512 = vunpack.c.l.b16 %v476
      %v513 = vunpack.c.l.b16 %v477
      %v514 = vpack.c.b16 %v499, %v498
      %v515 = vpack.c.b16 %v501, %v500
      %v516 = vpack.c.b16 %v503, %v502
      %v517 = vpack.c.b16 %v505, %v504
      %v518 = vpack.c.b16 %v507, %v506
      %v519 = vpack.c.b16 %v509, %v508
      %v520 = vpack.c.b16 %v511, %v510
      %v521 = vpack.c.b16 %v513, %v512
      %530 = vmatprep.subr.bf16.mxu0 0
      %531 = vmatpush1.bf16.msra.mxu0 %v514
      %532 = vmatprep.subr.bf16.mxu0 0
      %533 = vmatpush1.bf16.msra.mxu0 %v515
      %534 = vmatprep.subr.bf16.mxu0 0
      %535 = vmatpush1.bf16.msra.mxu0 %v516
      %536 = vmatprep.subr.bf16.mxu0 0
      %537 = vmatpush1.bf16.msra.mxu0 %v517
      %538 = vmatprep.subr.bf16.mxu0 0
      %539 = vmatpush1.bf16.msra.mxu0 %v518
      %540 = vmatprep.subr.bf16.mxu0 0
      %541 = vmatpush1.bf16.msra.mxu0 %v519
      %542 = vmatprep.subr.bf16.mxu0 0
      %543 = vmatpush1.bf16.msra.mxu0 %v520
      %544 = vmatprep.subr.bf16.mxu0 0
      %545 = vmatpush1.bf16.msra.mxu0 %v521
      %546 = vmatprep.subr.bf16.mxu0 0
      %547 = vmatpush1.bf16.msra.mxu0 0
      %548 = vmatprep.subr.bf16.mxu0 0
      %549 = vmatpush1.bf16.msra.mxu0 0
      %550 = vmatprep.subr.bf16.mxu0 0
      %551 = vmatpush1.bf16.msra.mxu0 0
      %552 = vmatprep.subr.bf16.mxu0 0
      %553 = vmatpush1.bf16.msra.mxu0 0
      %554 = vmatprep.subr.bf16.mxu0 0
      %555 = vmatpush1.bf16.msra.mxu0 0
      %556 = vmatprep.subr.bf16.mxu0 0
      %557 = vmatpush1.bf16.msra.mxu0 0
      %558 = vmatprep.subr.bf16.mxu0 0
      %559 = vmatpush1.bf16.msra.mxu0 0
      %560 = vmatprep.subr.bf16.mxu0 0
      %561 = vmatpush1.bf16.msra.mxu0 0
      %562 = vmatprep.mubr.bf16.mxu0 0
      %563 = vmatmul.mubr.bf16.gmra.mrb[0].mxu0 %v461
      %v564 = vpop.f32.mrb[0].mxu0
      %v565 = vadd.f32 %v481, %v564
      %v566 = vpop.f32.mrb[0].mxu0
      %v567 = vpop.f32.mrb[0].mxu0
      %v568 = vadd.f32 %v481, %v567
      %v569 = vpop.f32.mrb[0].mxu0
      %570 = vdwg.mxu0
      %v571 = vxor.u32 %v565, 2147483648
      %v572 = vxor.u32 %v568, 2147483648
      %v573 = vmul.f32 %v571, 1.442695
      %v574 = vpow.pop %v573
      %v575 = vmul.f32 %v572, 1.442695
      %v576 = vpow.pop %v575
      %v577 = vadd.f32 %v574, 1.0
      %v578 = vadd.f32 %v576, 1.0
      %v579 = vrcp.pop %v577
      %v580 = vmul.f32 1.0, %v579
      %v581 = vrcp.pop %v578
      %v582 = vmul.f32 1.0, %v581
      %v583 = vpack.c.bf16 %v582, %v580
      %v585 = vunpack.c.l.b16 %v583
      %v586 = vunpack.c.h.b16 %v583
      %v587 = vpack.c.b16 %v585, %v585
      %v588 = vpack.c.b16 %v586, %v586
      %591 = vst [vmem:[%s226] sm:$0xf] %v587
      %592 = vst [vmem:[%s226 + $0x4] sm:$0xf] %v588
      %s593 = smul.u32 2, %s16
      %p594 = scmp.lt.s32.totalorder %s593, 3
      %s595 = scalar_select %p594, %s593, 3
      %s596 = smul.addr %s595, 4
      %s597 = scalar_lea.vmem %s5, %s596
      // Predicated region
      $region41: #{forward.1} parent=39 // pred_check
        %p598 = pneg %p144
      $region42: #{forward.1} parent=39 // pred_check_branch
        %600 = sbr.rel (%p598) target = $region44
      $region43: #{forward.1} parent=39 // pred_region
        %s601 = smul.u32 2, %s16
      $region44: #{forward.1} parent=39 // pred_fallthru
        _
    $region40: #{forward.1} parent=5 // pred_fallthru
      _
    %p602 = scmp.le.s32.totalorder 2, %s11
    // Predicated region
    $region45: #{forward.1} parent=5 // pred_check
      %p603 = pneg %p602
    $region46: #{forward.1} parent=5 // pred_check_branch
      %605 = sbr.rel (%p603) target = $region48
    $region47: #{forward.1} parent=5 // pred_region
      %s606 = ssub.s32 %s11, 2
      // Predicated region
      $region49: #{forward.1} parent=47 // pred_check
        %p607 = pneg %p150
      $region50: #{forward.1} parent=47 // pred_check_branch
        %609 = sbr.rel (%p607) target = $region52
      $region51: #{forward.1} parent=47 // pred_region
        %s610 = smul.u32 2, %s17
        %p611 = scmp.lt.s32.totalorder %s610, 3
        %s612 = scalar_select %p611, %s610, 3
        %s613 = smul.addr %s612, 4
        %s614 = scalar_lea.vmem %s5, %s613
      $region52: #{forward.1} parent=47 // pred_fallthru
        _
    $region48: #{forward.1} parent=5 // pred_fallthru
      _
  $region6: #{forward.1} parent=0 // loop_footer
    %s15 = sadd.s32 1, %s11
  $region7: #{forward.1} parent=0 // loop_footer_branch
    %10 = sbr.rel target = $region3
  $region8: #{forward.1} parent=0 // loop_exit
    _

</llo_original>
